<compile_context>
chip_gen: v7x
topology: tpu7x:2x2x1
jax: 0.10.0
libtpu: 0.0.40
codegen_flags: <defaults>
</compile_context>

<pallas_src>
import jax
import jax.numpy as jnp
from jax.experimental import pallas as pl
from jax.experimental.pallas import tpu as pltpu


def _maxpool2x2_kernel(x_ref, o_ref):
    """2x2 stride-2 max pool: x_ref (N,C,H,W) -> o_ref (N,C,Ho,Wo)."""
    n, c, h, w = x_ref.shape
    _, _, ho, wo = o_ref.shape

    x = x_ref[...]                                              # (N, C, H, W)

    # ---- vertical step: adjacent-row max, then compact even rows ----------
    # m_rows[:, :, j, :] = max(x[:, :, j, :], x[:, :, j+1, :]); the values we
    # need live at even j.  Compact them into Ho dense rows with an
    # iota-masked select (sublane broadcast + select; NaN/Inf exact).
    m_rows = jnp.maximum(x[:, :, : h - 1, :], x[:, :, 1:h, :])  # (N,C,H-1,W)
    row_id = jax.lax.broadcasted_iota(jnp.int32, (n, c, ho, w), 2)
    v = jnp.zeros((n, c, ho, w), x.dtype)
    for r in range(ho):                                         # static unroll
        v = jnp.where(row_id == r, m_rows[:, :, 2 * r : 2 * r + 1, :], v)

    # ---- horizontal step: adjacent-column max, compact even columns -------
    m_cols = jnp.maximum(v[..., : w - 1], v[..., 1:w])          # (N,C,Ho,W-1)
    col_id = jax.lax.broadcasted_iota(jnp.int32, (n, c, ho, wo), 3)
    out = jnp.zeros((n, c, ho, wo), x.dtype)
    for k in range(wo):                                         # static unroll
        out = jnp.where(col_id == k, m_cols[..., 2 * k : 2 * k + 1], out)

    o_ref[...] = out.astype(o_ref.dtype)                        # one dense store


def basic_block_downsample_pool_pallas(x_nchw):
    """Forward pass of BasicBlock_downsample_pool: nn.MaxPool2d(2, stride=2)."""
    N, C, H, W = x_nchw.shape
    Ho, Wo = H // 2, W // 2
    if Ho == 0 or Wo == 0:
        raise ValueError("spatial dims must be >= 2 for MaxPool2d(2, stride=2)")

    flops = 3 * N * C * Ho * Wo                       # 3 maxes per output elem
    bytes_accessed = (N * C * H * W + N * C * Ho * Wo) * x_nchw.dtype.itemsize

    return pl.pallas_call(
        _maxpool2x2_kernel,
        out_shape=jax.ShapeDtypeStruct((N, C, Ho, Wo), x_nchw.dtype),
        in_specs=[pl.BlockSpec(memory_space=pltpu.MemorySpace.VMEM)],
        out_specs=pl.BlockSpec(memory_space=pltpu.MemorySpace.VMEM),
        cost_estimate=pl.CostEstimate(
            flops=flops, transcendentals=0, bytes_accessed=bytes_accessed),
    )(x_nchw)


def reference_forward(x_nchw):
    """Pure-JAX reference mirroring the PyTorch forward (MaxPool2d(2, 2))."""
    N, C, H, W = x_nchw.shape
    Ho, Wo = H // 2, W // 2
    xr = x_nchw[:, :, : 2 * Ho, : 2 * Wo].reshape(N, C, Ho, 2, Wo, 2)
    return xr.max(axis=(3, 5))


if __name__ == "__main__":
    key = jax.random.PRNGKey(0)

    N, C, H, W = 2, 4, 16, 16
    x = jax.random.normal(key, (N, C, H, W), jnp.float32)

    out = jax.block_until_ready(basic_block_downsample_pool_pallas(x))
    ref = reference_forward(x)

    assert out.shape == (N, C, H // 2, W // 2)
    assert bool(jnp.array_equal(out, ref))

    print("KERNEL_OK")
</pallas_src>

<mosaic_0001>
module attributes {stable_mosaic.version = 11 : i64} {
  func.func @_maxpool2x2_kernel(%arg0: memref<2x4x16x16xf32, #tpu.memory_space<vmem>>, %arg1: memref<2x4x8x8xf32, #tpu.memory_space<vmem>>) attributes {dimension_semantics = [], scalar_prefetch = 0 : i64, scratch_operands = 0 : i64, tpu.core_type = #tpu.core_type<tc>} {
    %c0 = arith.constant 0 : index
    %c0_0 = arith.constant 0 : index
    %c0_1 = arith.constant 0 : index
    %c0_2 = arith.constant 0 : index
    %0 = vector.load %arg0[%c0, %c0_0, %c0_1, %c0_2] : memref<2x4x16x16xf32, #tpu.memory_space<vmem>>, vector<2x4x16x16xf32>
    %1 = vector.extract_strided_slice %0 {offsets = [0, 0, 0, 0], sizes = [2, 4, 15, 16], strides = [1, 1, 1, 1]} : vector<2x4x16x16xf32> to vector<2x4x15x16xf32>
    %2 = vector.extract_strided_slice %0 {offsets = [0, 0, 1, 0], sizes = [2, 4, 15, 16], strides = [1, 1, 1, 1]} : vector<2x4x16x16xf32> to vector<2x4x15x16xf32>
    %3 = arith.maximumf %1, %2 : vector<2x4x15x16xf32>
    %4 = tpu.iota {dimensions = array<i32: 2>} : vector<2x4x8x16xi32>
    %cst = arith.constant 0.000000e+00 : f32
    %5 = vector.broadcast %cst : f32 to vector<2x4x8x16xf32>
    %c0_i32 = arith.constant 0 : i32
    %6 = vector.broadcast %c0_i32 : i32 to vector<2x4x8x16xi32>
    %7 = arith.cmpi eq, %4, %6 : vector<2x4x8x16xi32>
    %8 = vector.extract_strided_slice %3 {offsets = [0, 0, 0, 0], sizes = [2, 4, 1, 16], strides = [1, 1, 1, 1]} : vector<2x4x15x16xf32> to vector<2x4x1x16xf32>
    %9 = vector.shape_cast %8 : vector<2x4x1x16xf32> to vector<2x4x1x16xf32>
    %10 = vector.broadcast %9 : vector<2x4x1x16xf32> to vector<2x4x8x16xf32>
    %11 = arith.select %7, %10, %5 : vector<2x4x8x16xi1>, vector<2x4x8x16xf32>
    %c1_i32 = arith.constant 1 : i32
    %12 = vector.broadcast %c1_i32 : i32 to vector<2x4x8x16xi32>
    %13 = arith.cmpi eq, %4, %12 : vector<2x4x8x16xi32>
    %14 = vector.extract_strided_slice %3 {offsets = [0, 0, 2, 0], sizes = [2, 4, 1, 16], strides = [1, 1, 1, 1]} : vector<2x4x15x16xf32> to vector<2x4x1x16xf32>
    %15 = vector.shape_cast %14 : vector<2x4x1x16xf32> to vector<2x4x1x16xf32>
    %16 = vector.broadcast %15 : vector<2x4x1x16xf32> to vector<2x4x8x16xf32>
    %17 = arith.select %13, %16, %11 : vector<2x4x8x16xi1>, vector<2x4x8x16xf32>
    %c2_i32 = arith.constant 2 : i32
    %18 = vector.broadcast %c2_i32 : i32 to vector<2x4x8x16xi32>
    %19 = arith.cmpi eq, %4, %18 : vector<2x4x8x16xi32>
    %20 = vector.extract_strided_slice %3 {offsets = [0, 0, 4, 0], sizes = [2, 4, 1, 16], strides = [1, 1, 1, 1]} : vector<2x4x15x16xf32> to vector<2x4x1x16xf32>
    %21 = vector.shape_cast %20 : vector<2x4x1x16xf32> to vector<2x4x1x16xf32>
    %22 = vector.broadcast %21 : vector<2x4x1x16xf32> to vector<2x4x8x16xf32>
    %23 = arith.select %19, %22, %17 : vector<2x4x8x16xi1>, vector<2x4x8x16xf32>
    %c3_i32 = arith.constant 3 : i32
    %24 = vector.broadcast %c3_i32 : i32 to vector<2x4x8x16xi32>
    %25 = arith.cmpi eq, %4, %24 : vector<2x4x8x16xi32>
    %26 = vector.extract_strided_slice %3 {offsets = [0, 0, 6, 0], sizes = [2, 4, 1, 16], strides = [1, 1, 1, 1]} : vector<2x4x15x16xf32> to vector<2x4x1x16xf32>
    %27 = vector.shape_cast %26 : vector<2x4x1x16xf32> to vector<2x4x1x16xf32>
    %28 = vector.broadcast %27 : vector<2x4x1x16xf32> to vector<2x4x8x16xf32>
    %29 = arith.select %25, %28, %23 : vector<2x4x8x16xi1>, vector<2x4x8x16xf32>
    %c4_i32 = arith.constant 4 : i32
    %30 = vector.broadcast %c4_i32 : i32 to vector<2x4x8x16xi32>
    %31 = arith.cmpi eq, %4, %30 : vector<2x4x8x16xi32>
    %32 = vector.extract_strided_slice %3 {offsets = [0, 0, 8, 0], sizes = [2, 4, 1, 16], strides = [1, 1, 1, 1]} : vector<2x4x15x16xf32> to vector<2x4x1x16xf32>
    %33 = vector.shape_cast %32 : vector<2x4x1x16xf32> to vector<2x4x1x16xf32>
    %34 = vector.broadcast %33 : vector<2x4x1x16xf32> to vector<2x4x8x16xf32>
    %35 = arith.select %31, %34, %29 : vector<2x4x8x16xi1>, vector<2x4x8x16xf32>
    %c5_i32 = arith.constant 5 : i32
    %36 = vector.broadcast %c5_i32 : i32 to vector<2x4x8x16xi32>
    %37 = arith.cmpi eq, %4, %36 : vector<2x4x8x16xi32>
    %38 = vector.extract_strided_slice %3 {offsets = [0, 0, 10, 0], sizes = [2, 4, 1, 16], strides = [1, 1, 1, 1]} : vector<2x4x15x16xf32> to vector<2x4x1x16xf32>
    %39 = vector.shape_cast %38 : vector<2x4x1x16xf32> to vector<2x4x1x16xf32>
    %40 = vector.broadcast %39 : vector<2x4x1x16xf32> to vector<2x4x8x16xf32>
    %41 = arith.select %37, %40, %35 : vector<2x4x8x16xi1>, vector<2x4x8x16xf32>
    %c6_i32 = arith.constant 6 : i32
    %42 = vector.broadcast %c6_i32 : i32 to vector<2x4x8x16xi32>
    %43 = arith.cmpi eq, %4, %42 : vector<2x4x8x16xi32>
    %44 = vector.extract_strided_slice %3 {offsets = [0, 0, 12, 0], sizes = [2, 4, 1, 16], strides = [1, 1, 1, 1]} : vector<2x4x15x16xf32> to vector<2x4x1x16xf32>
    %45 = vector.shape_cast %44 : vector<2x4x1x16xf32> to vector<2x4x1x16xf32>
    %46 = vector.broadcast %45 : vector<2x4x1x16xf32> to vector<2x4x8x16xf32>
    %47 = arith.select %43, %46, %41 : vector<2x4x8x16xi1>, vector<2x4x8x16xf32>
    %c7_i32 = arith.constant 7 : i32
    %48 = vector.broadcast %c7_i32 : i32 to vector<2x4x8x16xi32>
    %49 = arith.cmpi eq, %4, %48 : vector<2x4x8x16xi32>
    %50 = vector.extract_strided_slice %3 {offsets = [0, 0, 14, 0], sizes = [2, 4, 1, 16], strides = [1, 1, 1, 1]} : vector<2x4x15x16xf32> to vector<2x4x1x16xf32>
    %51 = vector.shape_cast %50 : vector<2x4x1x16xf32> to vector<2x4x1x16xf32>
    %52 = vector.broadcast %51 : vector<2x4x1x16xf32> to vector<2x4x8x16xf32>
    %53 = arith.select %49, %52, %47 : vector<2x4x8x16xi1>, vector<2x4x8x16xf32>
    %54 = vector.extract_strided_slice %53 {offsets = [0, 0, 0, 0], sizes = [2, 4, 8, 15], strides = [1, 1, 1, 1]} : vector<2x4x8x16xf32> to vector<2x4x8x15xf32>
    %55 = vector.extract_strided_slice %53 {offsets = [0, 0, 0, 1], sizes = [2, 4, 8, 15], strides = [1, 1, 1, 1]} : vector<2x4x8x16xf32> to vector<2x4x8x15xf32>
    %56 = arith.maximumf %54, %55 : vector<2x4x8x15xf32>
    %57 = tpu.iota {dimensions = array<i32: 3>} : vector<2x4x8x8xi32>
    %cst_3 = arith.constant 0.000000e+00 : f32
    %58 = vector.broadcast %cst_3 : f32 to vector<2x4x8x8xf32>
    %c0_i32_4 = arith.constant 0 : i32
    %59 = vector.broadcast %c0_i32_4 : i32 to vector<2x4x8x8xi32>
    %60 = arith.cmpi eq, %57, %59 : vector<2x4x8x8xi32>
    %61 = vector.extract_strided_slice %56 {offsets = [0, 0, 0, 0], sizes = [2, 4, 8, 1], strides = [1, 1, 1, 1]} : vector<2x4x8x15xf32> to vector<2x4x8x1xf32>
    %62 = vector.shape_cast %61 : vector<2x4x8x1xf32> to vector<2x4x8x1xf32>
    %63 = vector.broadcast %62 : vector<2x4x8x1xf32> to vector<2x4x8x8xf32>
    %64 = arith.select %60, %63, %58 : vector<2x4x8x8xi1>, vector<2x4x8x8xf32>
    %c1_i32_5 = arith.constant 1 : i32
    %65 = vector.broadcast %c1_i32_5 : i32 to vector<2x4x8x8xi32>
    %66 = arith.cmpi eq, %57, %65 : vector<2x4x8x8xi32>
    %67 = vector.extract_strided_slice %56 {offsets = [0, 0, 0, 2], sizes = [2, 4, 8, 1], strides = [1, 1, 1, 1]} : vector<2x4x8x15xf32> to vector<2x4x8x1xf32>
    %68 = vector.shape_cast %67 : vector<2x4x8x1xf32> to vector<2x4x8x1xf32>
    %69 = vector.broadcast %68 : vector<2x4x8x1xf32> to vector<2x4x8x8xf32>
    %70 = arith.select %66, %69, %64 : vector<2x4x8x8xi1>, vector<2x4x8x8xf32>
    %c2_i32_6 = arith.constant 2 : i32
    %71 = vector.broadcast %c2_i32_6 : i32 to vector<2x4x8x8xi32>
    %72 = arith.cmpi eq, %57, %71 : vector<2x4x8x8xi32>
    %73 = vector.extract_strided_slice %56 {offsets = [0, 0, 0, 4], sizes = [2, 4, 8, 1], strides = [1, 1, 1, 1]} : vector<2x4x8x15xf32> to vector<2x4x8x1xf32>
    %74 = vector.shape_cast %73 : vector<2x4x8x1xf32> to vector<2x4x8x1xf32>
    %75 = vector.broadcast %74 : vector<2x4x8x1xf32> to vector<2x4x8x8xf32>
    %76 = arith.select %72, %75, %70 : vector<2x4x8x8xi1>, vector<2x4x8x8xf32>
    %c3_i32_7 = arith.constant 3 : i32
    %77 = vector.broadcast %c3_i32_7 : i32 to vector<2x4x8x8xi32>
    %78 = arith.cmpi eq, %57, %77 : vector<2x4x8x8xi32>
    %79 = vector.extract_strided_slice %56 {offsets = [0, 0, 0, 6], sizes = [2, 4, 8, 1], strides = [1, 1, 1, 1]} : vector<2x4x8x15xf32> to vector<2x4x8x1xf32>
    %80 = vector.shape_cast %79 : vector<2x4x8x1xf32> to vector<2x4x8x1xf32>
    %81 = vector.broadcast %80 : vector<2x4x8x1xf32> to vector<2x4x8x8xf32>
    %82 = arith.select %78, %81, %76 : vector<2x4x8x8xi1>, vector<2x4x8x8xf32>
    %c4_i32_8 = arith.constant 4 : i32
    %83 = vector.broadcast %c4_i32_8 : i32 to vector<2x4x8x8xi32>
    %84 = arith.cmpi eq, %57, %83 : vector<2x4x8x8xi32>
    %85 = vector.extract_strided_slice %56 {offsets = [0, 0, 0, 8], sizes = [2, 4, 8, 1], strides = [1, 1, 1, 1]} : vector<2x4x8x15xf32> to vector<2x4x8x1xf32>
    %86 = vector.shape_cast %85 : vector<2x4x8x1xf32> to vector<2x4x8x1xf32>
    %87 = vector.broadcast %86 : vector<2x4x8x1xf32> to vector<2x4x8x8xf32>
    %88 = arith.select %84, %87, %82 : vector<2x4x8x8xi1>, vector<2x4x8x8xf32>
    %c5_i32_9 = arith.constant 5 : i32
    %89 = vector.broadcast %c5_i32_9 : i32 to vector<2x4x8x8xi32>
    %90 = arith.cmpi eq, %57, %89 : vector<2x4x8x8xi32>
    %91 = vector.extract_strided_slice %56 {offsets = [0, 0, 0, 10], sizes = [2, 4, 8, 1], strides = [1, 1, 1, 1]} : vector<2x4x8x15xf32> to vector<2x4x8x1xf32>
    %92 = vector.shape_cast %91 : vector<2x4x8x1xf32> to vector<2x4x8x1xf32>
    %93 = vector.broadcast %92 : vector<2x4x8x1xf32> to vector<2x4x8x8xf32>
    %94 = arith.select %90, %93, %88 : vector<2x4x8x8xi1>, vector<2x4x8x8xf32>
    %c6_i32_10 = arith.constant 6 : i32
    %95 = vector.broadcast %c6_i32_10 : i32 to vector<2x4x8x8xi32>
    %96 = arith.cmpi eq, %57, %95 : vector<2x4x8x8xi32>
    %97 = vector.extract_strided_slice %56 {offsets = [0, 0, 0, 12], sizes = [2, 4, 8, 1], strides = [1, 1, 1, 1]} : vector<2x4x8x15xf32> to vector<2x4x8x1xf32>
    %98 = vector.shape_cast %97 : vector<2x4x8x1xf32> to vector<2x4x8x1xf32>
    %99 = vector.broadcast %98 : vector<2x4x8x1xf32> to vector<2x4x8x8xf32>
    %100 = arith.select %96, %99, %94 : vector<2x4x8x8xi1>, vector<2x4x8x8xf32>
    %c7_i32_11 = arith.constant 7 : i32
    %101 = vector.broadcast %c7_i32_11 : i32 to vector<2x4x8x8xi32>
    %102 = arith.cmpi eq, %57, %101 : vector<2x4x8x8xi32>
    %103 = vector.extract_strided_slice %56 {offsets = [0, 0, 0, 14], sizes = [2, 4, 8, 1], strides = [1, 1, 1, 1]} : vector<2x4x8x15xf32> to vector<2x4x8x1xf32>
    %104 = vector.shape_cast %103 : vector<2x4x8x1xf32> to vector<2x4x8x1xf32>
    %105 = vector.broadcast %104 : vector<2x4x8x1xf32> to vector<2x4x8x8xf32>
    %106 = arith.select %102, %105, %100 : vector<2x4x8x8xi1>, vector<2x4x8x8xf32>
    %c0_12 = arith.constant 0 : index
    %c0_13 = arith.constant 0 : index
    %c0_14 = arith.constant 0 : index
    %c0_15 = arith.constant 0 : index
    %107 = vector.load %arg1[%c0_12, %c0_13, %c0_14, %c0_15] : memref<2x4x8x8xf32, #tpu.memory_space<vmem>>, vector<2x4x8x8xf32>
    tpu.vector_store %arg1[%c0_12, %c0_13, %c0_14, %c0_15], %106 {strides = array<i32>} : memref<2x4x8x8xf32, #tpu.memory_space<vmem>>, vector<2x4x8x8xf32>,
    return
  }
}

</mosaic_0001>

<llo_original>
// kernel: tpu_custom_call.1
$region0: #{tpu_custom_call.1}
  #allocation0 [shape = 'u32[]', space=smem, size = 0x4, offset = 0x4, fixed_abs, tag = 'smem constant byte address 0x4 - core index']
  #allocation1 [shape = 'u32[144,128]{1,0:T(1,128)}', space=vmem, size = 0x12000, scoped, tag = 'internal scratch']
  %s0 = inlined_call_operand.hbm [shape: f32[2,4,16,16], index: 0, kind: input, shape index: {}]
  %s1 = inlined_call_operand.hbm [shape: f32[2,4,8,8], index: 1, kind: output, shape index: {}]
  %s2 = sld [smem:[#allocation0]]
  $region18: #{tpu_custom_call.1} parent=0
    _
  %s4 = ssub.s32 1, %s2
  %s5 = scalar_select 0, %s4, %s2
  $region1: #{tpu_custom_call.1} parent=0
    #allocation2 [shape = 'u8[65536]{0}', space=vmem, size = 0x10000, scoped, tag = 'input window, operand 0, single buffered']
    #allocation3 [shape = 's32[1]{0}', space=sflag, size = 0x4, scoped, tag = 'scoped memory for tpu_custom_call.1']
    #allocation4 [shape = 's32[1]{0}', space=sflag, size = 0x4, scoped, tag = 'scoped memory for tpu_custom_call.1']
    #allocation5 [shape = 'u8[32768]{0}', space=vmem, size = 0x8000, scoped, tag = 'output window, operand 0, single buffered']
    %6 = vsyncpa [#allocation3], 0
    %7 = vsyncpa [#allocation4], 0
    // Predicated region
    $region2: #{tpu_custom_call.1} parent=1 // pred_check
      _
    $region3: #{tpu_custom_call.1} parent=1 // pred_check_branch
      %9 = sbr.rel (0) target = $region5
    $region4: #{tpu_custom_call.1} parent=1 // pred_region
      %s11 = ssub.s32 2048, 2048
      %12 = vsyncadd [#allocation3], %s11
      %s13 = sshll.u32 [#allocation2], 4
      %s14 = int_to_ptr.vmem [resolvable:$true] %s13
      %19 = dma.hbm_to_vmem [thread:$0]  %s0, 2048, %s14, [#allocation3], 128, 128, 8
    $region5: #{tpu_custom_call.1} parent=1 // pred_fallthru
      _
    // Predicated region
    $region6: #{tpu_custom_call.1} parent=1 // pred_check
      _
    $region7: #{tpu_custom_call.1} parent=1 // pred_check_branch
      %21 = sbr.rel (0) target = $region9
    $region8: #{tpu_custom_call.1} parent=1 // pred_region
      %22 = dma.done [#allocation3], 2048
    $region9: #{tpu_custom_call.1} parent=1 // pred_fallthru
      _
    %v23 = vld [vmem:[#allocation2] sm:$0xff]
    %v24 = vld [vmem:[#allocation2 + $0x8] sm:$0xff]
    %v25 = vld [vmem:[#allocation2 + $0x10] sm:$0xff]
    %v26 = vld [vmem:[#allocation2 + $0x18] sm:$0xff]
    %v27 = vld [vmem:[#allocation2 + $0x20] sm:$0xff]
    %v28 = vld [vmem:[#allocation2 + $0x28] sm:$0xff]
    %v29 = vld [vmem:[#allocation2 + $0x30] sm:$0xff]
    %v30 = vld [vmem:[#allocation2 + $0x38] sm:$0xff]
    %v31 = vld [vmem:[#allocation2 + $0x40] sm:$0xff]
    %v32 = vld [vmem:[#allocation2 + $0x48] sm:$0xff]
    %v33 = vld [vmem:[#allocation2 + $0x50] sm:$0xff]
    %v34 = vld [vmem:[#allocation2 + $0x58] sm:$0xff]
    %v35 = vld [vmem:[#allocation2 + $0x60] sm:$0xff]
    %v36 = vld [vmem:[#allocation2 + $0x68] sm:$0xff]
    %v37 = vld [vmem:[#allocation2 + $0x70] sm:$0xff]
    %v38 = vld [vmem:[#allocation2 + $0x78] sm:$0xff]
    %vm55 = vcmask 1046528
    %v56 = vrot.slane %v23, 1
    %v57 = vrot.slane %v24, 1
    %v58 = vsel %vm55, %v56, %v57
    %v59 = vrot.slane %v25, 1
    %v60 = vrot.slane %v26, 1
    %v61 = vsel %vm55, %v59, %v60
    %v62 = vrot.slane %v27, 1
    %v63 = vrot.slane %v28, 1
    %v64 = vsel %vm55, %v62, %v63
    %v65 = vrot.slane %v29, 1
    %v66 = vrot.slane %v30, 1
    %v67 = vsel %vm55, %v65, %v66
    %v68 = vrot.slane %v31, 1
    %v69 = vrot.slane %v32, 1
    %v70 = vsel %vm55, %v68, %v69
    %v71 = vrot.slane %v33, 1
    %v72 = vrot.slane %v34, 1
    %v73 = vsel %vm55, %v71, %v72
    %v74 = vrot.slane %v35, 1
    %v75 = vrot.slane %v36, 1
    %v76 = vsel %vm55, %v74, %v75
    %v77 = vrot.slane %v37, 1
    %v78 = vrot.slane %v38, 1
    %v79 = vsel %vm55, %v77, %v78
    %v96 = vmax.f32 %v23, %v58
    %v97 = vmax.f32 %v24, %v57
    %v98 = vmax.f32 %v25, %v61
    %v99 = vmax.f32 %v26, %v60
    %v100 = vmax.f32 %v27, %v64
    %v101 = vmax.f32 %v28, %v63
    %v102 = vmax.f32 %v29, %v67
    %v103 = vmax.f32 %v30, %v66
    %v104 = vmax.f32 %v31, %v70
    %v105 = vmax.f32 %v32, %v69
    %v106 = vmax.f32 %v33, %v73
    %v107 = vmax.f32 %v34, %v72
    %v108 = vmax.f32 %v35, %v76
    %v109 = vmax.f32 %v36, %v75
    %v110 = vmax.f32 %v37, %v79
    %v111 = vmax.f32 %v38, %v78
    %v112 = vlaneseq
    %v113 = vshrl.u32 %v112, 7
    %vm114 = vcmp.eq.s32.totalorder %v113, 0
    %v115 = vlaneseq
    %v116 = vshrl.u32 %v115, 7
    %v117 = vsub.s32 0, %v116
    %v118 = vrot.slane %v96, %v117
    %v119 = vlaneseq
    %v120 = vshrl.u32 %v119, 7
    %v121 = vsub.s32 0, %v120
    %v122 = vrot.slane %v98, %v121
    %v123 = vlaneseq
    %v124 = vshrl.u32 %v123, 7
    %v125 = vsub.s32 0, %v124
    %v126 = vrot.slane %v100, %v125
    %v127 = vlaneseq
    %v128 = vshrl.u32 %v127, 7
    %v129 = vsub.s32 0, %v128
    %v130 = vrot.slane %v102, %v129
    %v131 = vlaneseq
    %v132 = vshrl.u32 %v131, 7
    %v133 = vsub.s32 0, %v132
    %v134 = vrot.slane %v104, %v133
    %v135 = vlaneseq
    %v136 = vshrl.u32 %v135, 7
    %v137 = vsub.s32 0, %v136
    %v138 = vrot.slane %v106, %v137
    %v139 = vlaneseq
    %v140 = vshrl.u32 %v139, 7
    %v141 = vsub.s32 0, %v140
    %v142 = vrot.slane %v108, %v141
    %v143 = vlaneseq
    %v144 = vshrl.u32 %v143, 7
    %v145 = vsub.s32 0, %v144
    %v146 = vrot.slane %v110, %v145
    %v147 = vsel %vm114, %v118, 0.0
    %v148 = vsel %vm114, %v122, 0.0
    %v149 = vsel %vm114, %v126, 0.0
    %v150 = vsel %vm114, %v130, 0.0
    %v151 = vsel %vm114, %v134, 0.0
    %v152 = vsel %vm114, %v138, 0.0
    %v153 = vsel %vm114, %v142, 0.0
    %v154 = vsel %vm114, %v146, 0.0
    %vm155 = vcmp.eq.s32.totalorder %v113, 1
    %v156 = vlaneseq
    %v157 = vshrl.u32 %v156, 7
    %v158 = vsub.s32 2, %v157
    %v159 = vrot.slane %v96, %v158
    %v160 = vlaneseq
    %v161 = vshrl.u32 %v160, 7
    %v162 = vsub.s32 2, %v161
    %v163 = vrot.slane %v98, %v162
    %v164 = vlaneseq
    %v165 = vshrl.u32 %v164, 7
    %v166 = vsub.s32 2, %v165
    %v167 = vrot.slane %v100, %v166
    %v168 = vlaneseq
    %v169 = vshrl.u32 %v168, 7
    %v170 = vsub.s32 2, %v169
    %v171 = vrot.slane %v102, %v170
    %v172 = vlaneseq
    %v173 = vshrl.u32 %v172, 7
    %v174 = vsub.s32 2, %v173
    %v175 = vrot.slane %v104, %v174
    %v176 = vlaneseq
    %v177 = vshrl.u32 %v176, 7
    %v178 = vsub.s32 2, %v177
    %v179 = vrot.slane %v106, %v178
    %v180 = vlaneseq
    %v181 = vshrl.u32 %v180, 7
    %v182 = vsub.s32 2, %v181
    %v183 = vrot.slane %v108, %v182
    %v184 = vlaneseq
    %v185 = vshrl.u32 %v184, 7
    %v186 = vsub.s32 2, %v185
    %v187 = vrot.slane %v110, %v186
    %v188 = vsel %vm155, %v159, %v147
    %v189 = vsel %vm155, %v163, %v148
    %v190 = vsel %vm155, %v167, %v149
    %v191 = vsel %vm155, %v171, %v150
    %v192 = vsel %vm155, %v175, %v151
    %v193 = vsel %vm155, %v179, %v152
    %v194 = vsel %vm155, %v183, %v153
    %v195 = vsel %vm155, %v187, %v154
    %vm196 = vcmp.eq.s32.totalorder %v113, 2
    %v197 = vlaneseq
    %v198 = vshrl.u32 %v197, 7
    %v199 = vsub.s32 4, %v198
    %v200 = vrot.slane %v96, %v199
    %v201 = vlaneseq
    %v202 = vshrl.u32 %v201, 7
    %v203 = vsub.s32 4, %v202
    %v204 = vrot.slane %v98, %v203
    %v205 = vlaneseq
    %v206 = vshrl.u32 %v205, 7
    %v207 = vsub.s32 4, %v206
    %v208 = vrot.slane %v100, %v207
    %v209 = vlaneseq
    %v210 = vshrl.u32 %v209, 7
    %v211 = vsub.s32 4, %v210
    %v212 = vrot.slane %v102, %v211
    %v213 = vlaneseq
    %v214 = vshrl.u32 %v213, 7
    %v215 = vsub.s32 4, %v214
    %v216 = vrot.slane %v104, %v215
    %v217 = vlaneseq
    %v218 = vshrl.u32 %v217, 7
    %v219 = vsub.s32 4, %v218
    %v220 = vrot.slane %v106, %v219
    %v221 = vlaneseq
    %v222 = vshrl.u32 %v221, 7
    %v223 = vsub.s32 4, %v222
    %v224 = vrot.slane %v108, %v223
    %v225 = vlaneseq
    %v226 = vshrl.u32 %v225, 7
    %v227 = vsub.s32 4, %v226
    %v228 = vrot.slane %v110, %v227
    %v229 = vsel %vm196, %v200, %v188
    %v230 = vsel %vm196, %v204, %v189
    %v231 = vsel %vm196, %v208, %v190
    %v232 = vsel %vm196, %v212, %v191
    %v233 = vsel %vm196, %v216, %v192
    %v234 = vsel %vm196, %v220, %v193
    %v235 = vsel %vm196, %v224, %v194
    %v236 = vsel %vm196, %v228, %v195
    %vm237 = vcmp.eq.s32.totalorder %v113, 3
    %v238 = vlaneseq
    %v239 = vshrl.u32 %v238, 7
    %v240 = vsub.s32 6, %v239
    %v241 = vrot.slane %v96, %v240
    %v242 = vlaneseq
    %v243 = vshrl.u32 %v242, 7
    %v244 = vsub.s32 6, %v243
    %v245 = vrot.slane %v98, %v244
    %v246 = vlaneseq
    %v247 = vshrl.u32 %v246, 7
    %v248 = vsub.s32 6, %v247
    %v249 = vrot.slane %v100, %v248
    %v250 = vlaneseq
    %v251 = vshrl.u32 %v250, 7
    %v252 = vsub.s32 6, %v251
    %v253 = vrot.slane %v102, %v252
    %v254 = vlaneseq
    %v255 = vshrl.u32 %v254, 7
    %v256 = vsub.s32 6, %v255
    %v257 = vrot.slane %v104, %v256
    %v258 = vlaneseq
    %v259 = vshrl.u32 %v258, 7
    %v260 = vsub.s32 6, %v259
    %v261 = vrot.slane %v106, %v260
    %v262 = vlaneseq
    %v263 = vshrl.u32 %v262, 7
    %v264 = vsub.s32 6, %v263
    %v265 = vrot.slane %v108, %v264
    %v266 = vlaneseq
    %v267 = vshrl.u32 %v266, 7
    %v268 = vsub.s32 6, %v267
    %v269 = vrot.slane %v110, %v268
    %v270 = vsel %vm237, %v241, %v229
    %v271 = vsel %vm237, %v245, %v230
    %v272 = vsel %vm237, %v249, %v231
    %v273 = vsel %vm237, %v253, %v232
    %v274 = vsel %vm237, %v257, %v233
    %v275 = vsel %vm237, %v261, %v234
    %v276 = vsel %vm237, %v265, %v235
    %v277 = vsel %vm237, %v269, %v236
    %vm278 = vcmp.eq.s32.totalorder %v113, 4
    %v279 = vlaneseq
    %v280 = vshrl.u32 %v279, 7
    %v281 = vsub.s32 0, %v280
    %v282 = vrot.slane %v97, %v281
    %v283 = vlaneseq
    %v284 = vshrl.u32 %v283, 7
    %v285 = vsub.s32 0, %v284
    %v286 = vrot.slane %v99, %v285
    %v287 = vlaneseq
    %v288 = vshrl.u32 %v287, 7
    %v289 = vsub.s32 0, %v288
    %v290 = vrot.slane %v101, %v289
    %v291 = vlaneseq
    %v292 = vshrl.u32 %v291, 7
    %v293 = vsub.s32 0, %v292
    %v294 = vrot.slane %v103, %v293
    %v295 = vlaneseq
    %v296 = vshrl.u32 %v295, 7
    %v297 = vsub.s32 0, %v296
    %v298 = vrot.slane %v105, %v297
    %v299 = vlaneseq
    %v300 = vshrl.u32 %v299, 7
    %v301 = vsub.s32 0, %v300
    %v302 = vrot.slane %v107, %v301
    %v303 = vlaneseq
    %v304 = vshrl.u32 %v303, 7
    %v305 = vsub.s32 0, %v304
    %v306 = vrot.slane %v109, %v305
    %v307 = vlaneseq
    %v308 = vshrl.u32 %v307, 7
    %v309 = vsub.s32 0, %v308
    %v310 = vrot.slane %v111, %v309
    %v311 = vsel %vm278, %v282, %v270
    %v312 = vsel %vm278, %v286, %v271
    %v313 = vsel %vm278, %v290, %v272
    %v314 = vsel %vm278, %v294, %v273
    %v315 = vsel %vm278, %v298, %v274
    %v316 = vsel %vm278, %v302, %v275
    %v317 = vsel %vm278, %v306, %v276
    %v318 = vsel %vm278, %v310, %v277
    %vm319 = vcmp.eq.s32.totalorder %v113, 5
    %v320 = vlaneseq
    %v321 = vshrl.u32 %v320, 7
    %v322 = vsub.s32 2, %v321
    %v323 = vrot.slane %v97, %v322
    %v324 = vlaneseq
    %v325 = vshrl.u32 %v324, 7
    %v326 = vsub.s32 2, %v325
    %v327 = vrot.slane %v99, %v326
    %v328 = vlaneseq
    %v329 = vshrl.u32 %v328, 7
    %v330 = vsub.s32 2, %v329
    %v331 = vrot.slane %v101, %v330
    %v332 = vlaneseq
    %v333 = vshrl.u32 %v332, 7
    %v334 = vsub.s32 2, %v333
    %v335 = vrot.slane %v103, %v334
    %v336 = vlaneseq
    %v337 = vshrl.u32 %v336, 7
    %v338 = vsub.s32 2, %v337
    %v339 = vrot.slane %v105, %v338
    %v340 = vlaneseq
    %v341 = vshrl.u32 %v340, 7
    %v342 = vsub.s32 2, %v341
    %v343 = vrot.slane %v107, %v342
    %v344 = vlaneseq
    %v345 = vshrl.u32 %v344, 7
    %v346 = vsub.s32 2, %v345
    %v347 = vrot.slane %v109, %v346
    %v348 = vlaneseq
    %v349 = vshrl.u32 %v348, 7
    %v350 = vsub.s32 2, %v349
    %v351 = vrot.slane %v111, %v350
    %v352 = vsel %vm319, %v323, %v311
    %v353 = vsel %vm319, %v327, %v312
    %v354 = vsel %vm319, %v331, %v313
    %v355 = vsel %vm319, %v335, %v314
    %v356 = vsel %vm319, %v339, %v315
    %v357 = vsel %vm319, %v343, %v316
    %v358 = vsel %vm319, %v347, %v317
    %v359 = vsel %vm319, %v351, %v318
    %vm360 = vcmp.eq.s32.totalorder %v113, 6
    %v361 = vlaneseq
    %v362 = vshrl.u32 %v361, 7
    %v363 = vsub.s32 4, %v362
    %v364 = vrot.slane %v97, %v363
    %v365 = vlaneseq
    %v366 = vshrl.u32 %v365, 7
    %v367 = vsub.s32 4, %v366
    %v368 = vrot.slane %v99, %v367
    %v369 = vlaneseq
    %v370 = vshrl.u32 %v369, 7
    %v371 = vsub.s32 4, %v370
    %v372 = vrot.slane %v101, %v371
    %v373 = vlaneseq
    %v374 = vshrl.u32 %v373, 7
    %v375 = vsub.s32 4, %v374
    %v376 = vrot.slane %v103, %v375
    %v377 = vlaneseq
    %v378 = vshrl.u32 %v377, 7
    %v379 = vsub.s32 4, %v378
    %v380 = vrot.slane %v105, %v379
    %v381 = vlaneseq
    %v382 = vshrl.u32 %v381, 7
    %v383 = vsub.s32 4, %v382
    %v384 = vrot.slane %v107, %v383
    %v385 = vlaneseq
    %v386 = vshrl.u32 %v385, 7
    %v387 = vsub.s32 4, %v386
    %v388 = vrot.slane %v109, %v387
    %v389 = vlaneseq
    %v390 = vshrl.u32 %v389, 7
    %v391 = vsub.s32 4, %v390
    %v392 = vrot.slane %v111, %v391
    %v393 = vsel %vm360, %v364, %v352
    %v394 = vsel %vm360, %v368, %v353
    %v395 = vsel %vm360, %v372, %v354
    %v396 = vsel %vm360, %v376, %v355
    %v397 = vsel %vm360, %v380, %v356
    %v398 = vsel %vm360, %v384, %v357
    %v399 = vsel %vm360, %v388, %v358
    %v400 = vsel %vm360, %v392, %v359
    %vm401 = vcmp.eq.s32.totalorder %v113, 7
    %v402 = vlaneseq
    %v403 = vshrl.u32 %v402, 7
    %v404 = vsub.s32 6, %v403
    %v405 = vrot.slane %v97, %v404
    %v406 = vlaneseq
    %v407 = vshrl.u32 %v406, 7
    %v408 = vsub.s32 6, %v407
    %v409 = vrot.slane %v99, %v408
    %v410 = vlaneseq
    %v411 = vshrl.u32 %v410, 7
    %v412 = vsub.s32 6, %v411
    %v413 = vrot.slane %v101, %v412
    %v414 = vlaneseq
    %v415 = vshrl.u32 %v414, 7
    %v416 = vsub.s32 6, %v415
    %v417 = vrot.slane %v103, %v416
    %v418 = vlaneseq
    %v419 = vshrl.u32 %v418, 7
    %v420 = vsub.s32 6, %v419
    %v421 = vrot.slane %v105, %v420
    %v422 = vlaneseq
    %v423 = vshrl.u32 %v422, 7
    %v424 = vsub.s32 6, %v423
    %v425 = vrot.slane %v107, %v424
    %v426 = vlaneseq
    %v427 = vshrl.u32 %v426, 7
    %v428 = vsub.s32 6, %v427
    %v429 = vrot.slane %v109, %v428
    %v430 = vlaneseq
    %v431 = vshrl.u32 %v430, 7
    %v432 = vsub.s32 6, %v431
    %v433 = vrot.slane %v111, %v432
    %v434 = vsel %vm401, %v405, %v393
    %v435 = vsel %vm401, %v409, %v394
    %v436 = vsel %vm401, %v413, %v395
    %v437 = vsel %vm401, %v417, %v396
    %v438 = vsel %vm401, %v421, %v397
    %v439 = vsel %vm401, %v425, %v398
    %v440 = vsel %vm401, %v429, %v399
    %v441 = vsel %vm401, %v433, %v400
    %450 = vrot.lane.b32.xlu0 %v434, 127
    %v451 = vpop.permute.xlu0 %450
    %452 = vrot.lane.b32.xlu0 %v435, 127
    %v453 = vpop.permute.xlu0 %452
    %454 = vrot.lane.b32.xlu0 %v436, 127
    %v455 = vpop.permute.xlu0 %454
    %456 = vrot.lane.b32.xlu0 %v437, 127
    %v457 = vpop.permute.xlu0 %456
    %458 = vrot.lane.b32.xlu0 %v438, 127
    %v459 = vpop.permute.xlu0 %458
    %460 = vrot.lane.b32.xlu0 %v439, 127
    %v461 = vpop.permute.xlu0 %460
    %462 = vrot.lane.b32.xlu0 %v440, 127
    %v463 = vpop.permute.xlu0 %462
    %464 = vrot.lane.b32.xlu0 %v441, 127
    %v465 = vpop.permute.xlu0 %464
    %v474 = vmax.f32 %v434, %v451
    %v475 = vmax.f32 %v435, %v453
    %v476 = vmax.f32 %v436, %v455
    %v477 = vmax.f32 %v437, %v457
    %v478 = vmax.f32 %v438, %v459
    %v479 = vmax.f32 %v439, %v461
    %v480 = vmax.f32 %v440, %v463
    %v481 = vmax.f32 %v441, %v465
    %v482 = vlaneseq
    %v483 = vand.u32 %v482, 127
    %vm484 = vcmp.eq.s32.totalorder %v483, 0
    %486 = vset.pattern.permute.xlu0 0
    %487 = vperm.xlu0 %486, %v474
    %v488 = vpop.permute.xlu0 %487
    %491 = vset.pattern.permute.xlu0 0
    %492 = vperm.xlu0 %491, %v475
    %v493 = vpop.permute.xlu0 %492
    %496 = vset.pattern.permute.xlu0 0
    %497 = vperm.xlu0 %496, %v476
    %v498 = vpop.permute.xlu0 %497
    %501 = vset.pattern.permute.xlu0 0
    %502 = vperm.xlu0 %501, %v477
    %v503 = vpop.permute.xlu0 %502
    %506 = vset.pattern.permute.xlu0 0
    %507 = vperm.xlu0 %506, %v478
    %v508 = vpop.permute.xlu0 %507
    %511 = vset.pattern.permute.xlu0 0
    %512 = vperm.xlu0 %511, %v479
    %v513 = vpop.permute.xlu0 %512
    %516 = vset.pattern.permute.xlu0 0
    %517 = vperm.xlu0 %516, %v480
    %v518 = vpop.permute.xlu0 %517
    %521 = vset.pattern.permute.xlu0 0
    %522 = vperm.xlu0 %521, %v481
    %v523 = vpop.permute.xlu0 %522
    %v525 = vsel %vm484, %v488, 0.0
    %v526 = vsel %vm484, %v493, 0.0
    %v527 = vsel %vm484, %v498, 0.0
    %v528 = vsel %vm484, %v503, 0.0
    %v529 = vsel %vm484, %v508, 0.0
    %v530 = vsel %vm484, %v513, 0.0
    %v531 = vsel %vm484, %v518, 0.0
    %v532 = vsel %vm484, %v523, 0.0
    %vm533 = vcmp.eq.s32.totalorder %v483, 1
    %534 = vset.pattern.permute.xlu0 2
    %535 = vperm.xlu0 %534, %v474
    %v536 = vpop.permute.xlu0 %535
    %538 = vset.pattern.permute.xlu0 2
    %539 = vperm.xlu0 %538, %v475
    %v540 = vpop.permute.xlu0 %539
    %542 = vset.pattern.permute.xlu0 2
    %543 = vperm.xlu0 %542, %v476
    %v544 = vpop.permute.xlu0 %543
    %546 = vset.pattern.permute.xlu0 2
    %547 = vperm.xlu0 %546, %v477
    %v548 = vpop.permute.xlu0 %547
    %550 = vset.pattern.permute.xlu0 2
    %551 = vperm.xlu0 %550, %v478
    %v552 = vpop.permute.xlu0 %551
    %554 = vset.pattern.permute.xlu0 2
    %555 = vperm.xlu0 %554, %v479
    %v556 = vpop.permute.xlu0 %555
    %558 = vset.pattern.permute.xlu0 2
    %559 = vperm.xlu0 %558, %v480
    %v560 = vpop.permute.xlu0 %559
    %562 = vset.pattern.permute.xlu0 2
    %563 = vperm.xlu0 %562, %v481
    %v564 = vpop.permute.xlu0 %563
    %v566 = vsel %vm533, %v536, %v525
    %v567 = vsel %vm533, %v540, %v526
    %v568 = vsel %vm533, %v544, %v527
    %v569 = vsel %vm533, %v548, %v528
    %v570 = vsel %vm533, %v552, %v529
    %v571 = vsel %vm533, %v556, %v530
    %v572 = vsel %vm533, %v560, %v531
    %v573 = vsel %vm533, %v564, %v532
    %vm574 = vcmp.eq.s32.totalorder %v483, 2
    %575 = vset.pattern.permute.xlu0 4
    %576 = vperm.xlu0 %575, %v474
    %v577 = vpop.permute.xlu0 %576
    %579 = vset.pattern.permute.xlu0 4
    %580 = vperm.xlu0 %579, %v475
    %v581 = vpop.permute.xlu0 %580
    %583 = vset.pattern.permute.xlu0 4
    %584 = vperm.xlu0 %583, %v476
    %v585 = vpop.permute.xlu0 %584
    %587 = vset.pattern.permute.xlu0 4
    %588 = vperm.xlu0 %587, %v477
    %v589 = vpop.permute.xlu0 %588
    %591 = vset.pattern.permute.xlu0 4
    %592 = vperm.xlu0 %591, %v478
    %v593 = vpop.permute.xlu0 %592
    %595 = vset.pattern.permute.xlu0 4
    %596 = vperm.xlu0 %595, %v479
    %v597 = vpop.permute.xlu0 %596
    %599 = vset.pattern.permute.xlu0 4
    %600 = vperm.xlu0 %599, %v480
    %v601 = vpop.permute.xlu0 %600
    %603 = vset.pattern.permute.xlu0 4
    %604 = vperm.xlu0 %603, %v481
    %v605 = vpop.permute.xlu0 %604
    %v607 = vsel %vm574, %v577, %v566
    %v608 = vsel %vm574, %v581, %v567
    %v609 = vsel %vm574, %v585, %v568
    %v610 = vsel %vm574, %v589, %v569
    %v611 = vsel %vm574, %v593, %v570
    %v612 = vsel %vm574, %v597, %v571
    %v613 = vsel %vm574, %v601, %v572
    %v614 = vsel %vm574, %v605, %v573
    %vm615 = vcmp.eq.s32.totalorder %v483, 3
    %616 = vset.pattern.permute.xlu0 6
    %617 = vperm.xlu0 %616, %v474
    %v618 = vpop.permute.xlu0 %617
    %620 = vset.pattern.permute.xlu0 6
    %621 = vperm.xlu0 %620, %v475
    %v622 = vpop.permute.xlu0 %621
    %624 = vset.pattern.permute.xlu0 6
    %625 = vperm.xlu0 %624, %v476
    %v626 = vpop.permute.xlu0 %625
    %628 = vset.pattern.permute.xlu0 6
    %629 = vperm.xlu0 %628, %v477
    %v630 = vpop.permute.xlu0 %629
    %632 = vset.pattern.permute.xlu0 6
    %633 = vperm.xlu0 %632, %v478
    %v634 = vpop.permute.xlu0 %633
    %636 = vset.pattern.permute.xlu0 6
    %637 = vperm.xlu0 %636, %v479
    %v638 = vpop.permute.xlu0 %637
    %640 = vset.pattern.permute.xlu0 6
    %641 = vperm.xlu0 %640, %v480
    %v642 = vpop.permute.xlu0 %641
    %644 = vset.pattern.permute.xlu0 6
    %645 = vperm.xlu0 %644, %v481
    %v646 = vpop.permute.xlu0 %645
    %v648 = vsel %vm615, %v618, %v607
    %v649 = vsel %vm615, %v622, %v608
    %v650 = vsel %vm615, %v626, %v609
    %v651 = vsel %vm615, %v630, %v610
    %v652 = vsel %vm615, %v634, %v611
    %v653 = vsel %vm615, %v638, %v612
    %v654 = vsel %vm615, %v642, %v613
    %v655 = vsel %vm615, %v646, %v614
    %vm656 = vcmp.eq.s32.totalorder %v483, 4
    %657 = vset.pattern.permute.xlu0 8
    %658 = vperm.xlu0 %657, %v474
    %v659 = vpop.permute.xlu0 %658
    %661 = vset.pattern.permute.xlu0 8
    %662 = vperm.xlu0 %661, %v475
    %v663 = vpop.permute.xlu0 %662
    %665 = vset.pattern.permute.xlu0 8
    %666 = vperm.xlu0 %665, %v476
    %v667 = vpop.permute.xlu0 %666
    %669 = vset.pattern.permute.xlu0 8
    %670 = vperm.xlu0 %669, %v477
    %v671 = vpop.permute.xlu0 %670
    %673 = vset.pattern.permute.xlu0 8
    %674 = vperm.xlu0 %673, %v478
    %v675 = vpop.permute.xlu0 %674
    %677 = vset.pattern.permute.xlu0 8
    %678 = vperm.xlu0 %677, %v479
    %v679 = vpop.permute.xlu0 %678
    %681 = vset.pattern.permute.xlu0 8
    %682 = vperm.xlu0 %681, %v480
    %v683 = vpop.permute.xlu0 %682
    %685 = vset.pattern.permute.xlu0 8
    %686 = vperm.xlu0 %685, %v481
    %v687 = vpop.permute.xlu0 %686
    %v689 = vsel %vm656, %v659, %v648
    %v690 = vsel %vm656, %v663, %v649
    %v691 = vsel %vm656, %v667, %v650
    %v692 = vsel %vm656, %v671, %v651
    %v693 = vsel %vm656, %v675, %v652
    %v694 = vsel %vm656, %v679, %v653
    %v695 = vsel %vm656, %v683, %v654
    %v696 = vsel %vm656, %v687, %v655
    %vm697 = vcmp.eq.s32.totalorder %v483, 5
    %698 = vset.pattern.permute.xlu0 10
    %699 = vperm.xlu0 %698, %v474
    %v700 = vpop.permute.xlu0 %699
    %702 = vset.pattern.permute.xlu0 10
    %703 = vperm.xlu0 %702, %v475
    %v704 = vpop.permute.xlu0 %703
    %706 = vset.pattern.permute.xlu0 10
    %707 = vperm.xlu0 %706, %v476
    %v708 = vpop.permute.xlu0 %707
    %710 = vset.pattern.permute.xlu0 10
    %711 = vperm.xlu0 %710, %v477
    %v712 = vpop.permute.xlu0 %711
    %714 = vset.pattern.permute.xlu0 10
    %715 = vperm.xlu0 %714, %v478
    %v716 = vpop.permute.xlu0 %715
    %718 = vset.pattern.permute.xlu0 10
    %719 = vperm.xlu0 %718, %v479
    %v720 = vpop.permute.xlu0 %719
    %722 = vset.pattern.permute.xlu0 10
    %723 = vperm.xlu0 %722, %v480
    %v724 = vpop.permute.xlu0 %723
    %726 = vset.pattern.permute.xlu0 10
    %727 = vperm.xlu0 %726, %v481
    %v728 = vpop.permute.xlu0 %727
    %v730 = vsel %vm697, %v700, %v689
    %v731 = vsel %vm697, %v704, %v690
    %v732 = vsel %vm697, %v708, %v691
    %v733 = vsel %vm697, %v712, %v692
    %v734 = vsel %vm697, %v716, %v693
    %v735 = vsel %vm697, %v720, %v694
    %v736 = vsel %vm697, %v724, %v695
    %v737 = vsel %vm697, %v728, %v696
    %vm738 = vcmp.eq.s32.totalorder %v483, 6
    %739 = vset.pattern.permute.xlu0 12
    %740 = vperm.xlu0 %739, %v474
    %v741 = vpop.permute.xlu0 %740
    %743 = vset.pattern.permute.xlu0 12
    %744 = vperm.xlu0 %743, %v475
    %v745 = vpop.permute.xlu0 %744
    %747 = vset.pattern.permute.xlu0 12
    %748 = vperm.xlu0 %747, %v476
    %v749 = vpop.permute.xlu0 %748
    %751 = vset.pattern.permute.xlu0 12
    %752 = vperm.xlu0 %751, %v477
    %v753 = vpop.permute.xlu0 %752
    %755 = vset.pattern.permute.xlu0 12
    %756 = vperm.xlu0 %755, %v478
    %v757 = vpop.permute.xlu0 %756
    %759 = vset.pattern.permute.xlu0 12
    %760 = vperm.xlu0 %759, %v479
    %v761 = vpop.permute.xlu0 %760
    %763 = vset.pattern.permute.xlu0 12
    %764 = vperm.xlu0 %763, %v480
    %v765 = vpop.permute.xlu0 %764
    %767 = vset.pattern.permute.xlu0 12
    %768 = vperm.xlu0 %767, %v481
    %v769 = vpop.permute.xlu0 %768
    %v771 = vsel %vm738, %v741, %v730
    %v772 = vsel %vm738, %v745, %v731
    %v773 = vsel %vm738, %v749, %v732
    %v774 = vsel %vm738, %v753, %v733
    %v775 = vsel %vm738, %v757, %v734
    %v776 = vsel %vm738, %v761, %v735
    %v777 = vsel %vm738, %v765, %v736
    %v778 = vsel %vm738, %v769, %v737
    %vm779 = vcmp.eq.s32.totalorder %v483, 7
    %780 = vset.pattern.permute.xlu0 14
    %781 = vperm.xlu0 %780, %v474
    %v782 = vpop.permute.xlu0 %781
    %784 = vset.pattern.permute.xlu0 14
    %785 = vperm.xlu0 %784, %v475
    %v786 = vpop.permute.xlu0 %785
    %788 = vset.pattern.permute.xlu0 14
    %789 = vperm.xlu0 %788, %v476
    %v790 = vpop.permute.xlu0 %789
    %792 = vset.pattern.permute.xlu0 14
    %793 = vperm.xlu0 %792, %v477
    %v794 = vpop.permute.xlu0 %793
    %796 = vset.pattern.permute.xlu0 14
    %797 = vperm.xlu0 %796, %v478
    %v798 = vpop.permute.xlu0 %797
    %800 = vset.pattern.permute.xlu0 14
    %801 = vperm.xlu0 %800, %v479
    %v802 = vpop.permute.xlu0 %801
    %804 = vset.pattern.permute.xlu0 14
    %805 = vperm.xlu0 %804, %v480
    %v806 = vpop.permute.xlu0 %805
    %808 = vset.pattern.permute.xlu0 14
    %809 = vperm.xlu0 %808, %v481
    %v810 = vpop.permute.xlu0 %809
    %v812 = vsel %vm779, %v782, %v771
    %v813 = vsel %vm779, %v786, %v772
    %v814 = vsel %vm779, %v790, %v773
    %v815 = vsel %vm779, %v794, %v774
    %v816 = vsel %vm779, %v798, %v775
    %v817 = vsel %vm779, %v802, %v776
    %v818 = vsel %vm779, %v806, %v777
    %v819 = vsel %vm779, %v810, %v778
    %vm820 = vcmask 64512
    %821 = vst.msk [vmem:[#allocation5] sm:$0xff] %vm820, %v812
    %822 = vst.msk [vmem:[#allocation5 + $0x8] sm:$0xff] %vm820, %v813
    %823 = vst.msk [vmem:[#allocation5 + $0x10] sm:$0xff] %vm820, %v814
    %824 = vst.msk [vmem:[#allocation5 + $0x18] sm:$0xff] %vm820, %v815
    %825 = vst.msk [vmem:[#allocation5 + $0x20] sm:$0xff] %vm820, %v816
    %826 = vst.msk [vmem:[#allocation5 + $0x28] sm:$0xff] %vm820, %v817
    %827 = vst.msk [vmem:[#allocation5 + $0x30] sm:$0xff] %vm820, %v818
    %828 = vst.msk [vmem:[#allocation5 + $0x38] sm:$0xff] %vm820, %v819
    // Predicated region
    $region10: #{tpu_custom_call.1} parent=1 // pred_check
      _
    $region11: #{tpu_custom_call.1} parent=1 // pred_check_branch
      %830 = sbr.rel (0) target = $region13
    $region12: #{tpu_custom_call.1} parent=1 // pred_region
      %s832 = ssub.s32 1024, 1024
      %833 = vsyncadd [#allocation4], %s832
      %s834 = sshll.u32 [#allocation5], 4
      %s835 = int_to_ptr.vmem [resolvable:$true] %s834
      %840 = dma.vmem_to_hbm [thread:$0]  %s835, 1024, %s1, [#allocation4], 128, 128, 8
    $region13: #{tpu_custom_call.1} parent=1 // pred_fallthru
      _
    // Predicated region
    $region14: #{tpu_custom_call.1} parent=1 // pred_check
      _
    $region15: #{tpu_custom_call.1} parent=1 // pred_check_branch
      %842 = sbr.rel (0) target = $region17
    $region16: #{tpu_custom_call.1} parent=1 // pred_region
      %843 = dma.done [#allocation4], 1024
    $region17: #{tpu_custom_call.1} parent=1 // pred_fallthru
      _
    %844 = vsyncpa [#allocation3], 1
    %845 = vsyncpa [#allocation4], 1

</llo_original>
